<compile_context>
chip_gen: v5e
topology: v5e:2x2
jax: 0.10.0
libtpu: 0.0.40
codegen_flags: <defaults>
</compile_context>

<pallas_src>
import functools

import jax
import jax.numpy as jnp
from jax.experimental import pallas as pl
from jax.experimental.pallas import tpu as pltpu


# ---------------------------------------------------------------------------
# Kernel
# ---------------------------------------------------------------------------
def _critic_kernel(x_ref, att_ref, w1x_ref, w1a_ref, b1_ref, w2_ref, b2_ref, o_ref):
    # x_ref  : [TB, resSize] f32     att_ref: [TB, attSize] f32
    # w1x_ref: [resSize, H]  wdt     w1a_ref: [attSize, H]  wdt    b1_ref: [1, H] f32
    # w2_ref : [H, 128]      wdt     (real fc2 weights in column 0, rest zero)
    # b2_ref : [1, 1] f32 scalar in SMEM
    # o_ref  : [TB, 128] f32 (lane-dense; wrapper keeps column 0)
    wdt = w1x_ref.dtype  # bf16 in production, f32 for exact-parity tests

    # fc1: x@W1x + att@W1a + b1   (MXU, f32 accumulation)
    z1 = jnp.dot(x_ref[...].astype(wdt), w1x_ref[...],
                 preferred_element_type=jnp.float32)
    z1 = z1 + jnp.dot(att_ref[...].astype(wdt), w1a_ref[...],
                      preferred_element_type=jnp.float32)
    z1 = z1 + b1_ref[...]                      # f32 elementwise (v5e-safe)

    # LeakyReLU(0.2): single vmax per element.
    a1 = jnp.maximum(z1, 0.2 * z1)

    # fc2 (padded to 128 lanes for an unmasked store).
    z2 = jnp.dot(a1.astype(wdt), w2_ref[...], preferred_element_type=jnp.float32)
    z2 = z2 + b2_ref[0, 0]
    o_ref[...] = z2.astype(o_ref.dtype)


# ---------------------------------------------------------------------------
# Wrapper helpers
# ---------------------------------------------------------------------------
def _physical_vmem_bytes():
    try:
        return int(getattr(pltpu.get_tpu_info(), "vmem_capacity_bytes", 64 << 20))
    except Exception:
        return 64 << 20  # conservative (v7x-sized) fallback


def _pick_vmem_limit():
    # Leave ~25% headroom for compiler scratch / spill: ~48 MiB on v7x,
    # ~96 MiB on v5e/v6e.
    return max(32 << 20, (_physical_vmem_bytes() * 3) // 4)


def _choose_batch_tile(batch, tb):
    """Batch tile: multiple of 8, and >= 2 grid steps whenever batch > 8 so the
    ("parallel",) axis feeds both v7x TensorCores / overlaps the pipeline."""
    if batch <= 8:
        return batch  # single full-extent block
    if tb is None:
        # 128 MiB-VMEM chips (v5e/v6e) amortize per-step overhead better with
        # 512-row tiles; keep 256 on 64 MiB (v7x).
        tb = 512 if _physical_vmem_bytes() >= (96 << 20) else 256
    tb = max(8, min(tb, batch))
    tb -= tb % 8
    max_half = max(8, ((batch // 2) // 8) * 8)  # force grid >= 2
    return min(tb, max_half)


def _resident_spec(shape):
    """Constant-index weight spec: stays resident in VMEM across batch steps.
    Buffered(1): the block never changes, so one buffer suffices (halves the
    resident weight VMEM vs the default double-buffering)."""
    index_map = lambda i: (0, 0)
    try:
        return pl.BlockSpec(shape, index_map, pipeline_mode=pl.Buffered(1))
    except Exception:  # API without pipeline_mode -> fall back to default buffering
        return pl.BlockSpec(shape, index_map)


# ---------------------------------------------------------------------------
# Forward
# ---------------------------------------------------------------------------
def mlp_critic_forward(x, att, kparams, *, tb=None):
    """Forward pass of MLP_CRITIC.

    x       : [B, resSize]  float32
    att     : [B, attSize]  float32
    kparams : dict produced by prepare_params() (kernel-layout weights)
    returns : [B, 1] float32
    """
    B, rs = x.shape
    _, asz = att.shape
    w1x, w1a = kparams["w1x"], kparams["w1a"]                    # [rs,H], [asz,H]
    b1, w2p, b2 = kparams["b1"], kparams["w2p"], kparams["b2"]   # [1,H], [H,128], [1,1]
    H = w1x.shape[1]

    tb = _choose_batch_tile(B, tb)
    grid = (pl.cdiv(B, tb),)

    wbytes = jnp.dtype(w1x.dtype).itemsize
    flops = 2 * B * (rs + asz) * H + 2 * B * H * 128
    bytes_accessed = (4 * B * (rs + asz)                    # activations (f32)
                      + wbytes * ((rs + asz) * H + H * 128)  # resident weights
                      + 4 * (H + 1)                          # biases (f32)
                      + 4 * B * 128)                         # padded output writeback

    out_padded = pl.pallas_call(
        _critic_kernel,
        out_shape=jax.ShapeDtypeStruct((B, 128), jnp.float32),
        grid=grid,
        in_specs=[
            # Activations: tiled over batch, double-buffered by the pipeline.
            pl.BlockSpec((tb, rs), lambda i: (i, 0)),
            pl.BlockSpec((tb, asz), lambda i: (i, 0)),
            # Weights / fc1 bias: constant block index -> resident in VMEM,
            # single-buffered, no re-DMA across batch steps.
            _resident_spec((rs, H)),
            _resident_spec((asz, H)),
            _resident_spec((1, H)),
            _resident_spec((H, 128)),
            # fc2 bias: scalar in SMEM.
            pl.BlockSpec(memory_space=pltpu.MemorySpace.SMEM),
        ],
        out_specs=pl.BlockSpec((tb, 128), lambda i: (i, 0)),
        compiler_params=pltpu.CompilerParams(
            dimension_semantics=("parallel",),
            vmem_limit_bytes=_pick_vmem_limit(),
        ),
        cost_estimate=pl.CostEstimate(
            flops=flops, transcendentals=0, bytes_accessed=bytes_accessed
        ),
    )(x, att, w1x, w1a, b1, w2p, b2)

    return out_padded[:, :1]


# ---------------------------------------------------------------------------
# Parameter init / layout prep
# ---------------------------------------------------------------------------
def init_params(key, res_size, att_size, ndh):
    """PyTorch-layout init mirroring weights_init: Linear weights ~ N(0, 0.02),
    biases = 0. PyTorch Linear weight shape is (out_features, in_features)."""
    k1, k2 = jax.random.split(key)
    d = res_size + att_size
    return {
        "w1": 0.02 * jax.random.normal(k1, (ndh, d), dtype=jnp.float32),
        "b1": jnp.zeros((ndh,), dtype=jnp.float32),
        "w2": 0.02 * jax.random.normal(k2, (1, ndh), dtype=jnp.float32),
        "b2": jnp.zeros((1,), dtype=jnp.float32),
    }


def prepare_params(params, res_size, *, weights_dtype=jnp.bfloat16):
    """One-time conversion from PyTorch layout to kernel layout (done at init,
    not per call).  weights_dtype=bf16 (default) halves resident VMEM and weight
    DMA and uses the MXU's native bf16 input path; pass jnp.float32 for exact
    PyTorch-parity numerics.  Biases stay f32 (elementwise path is f32)."""
    w1_t = jnp.asarray(params["w1"]).T                       # [D, H]
    w1x = w1_t[:res_size, :].astype(weights_dtype)           # [resSize, H]
    w1a = w1_t[res_size:, :].astype(weights_dtype)           # [attSize, H]
    b1 = jnp.asarray(params["b1"])[None, :].astype(jnp.float32)   # [1, H]
    w2_col = jnp.asarray(params["w2"]).T                     # [H, 1]
    w2p = jnp.pad(w2_col, ((0, 0), (0, 127))).astype(weights_dtype)  # [H, 128]
    b2 = jnp.asarray(params["b2"]).reshape(1, 1).astype(jnp.float32)  # [1, 1]
    return {"w1x": w1x, "w1a": w1a, "b1": b1, "w2p": w2p, "b2": b2}


# ---------------------------------------------------------------------------
# Self-test
# ---------------------------------------------------------------------------
if __name__ == "__main__":
    # Small, module-consistent shapes: args.resSize=32, args.attSize=16, args.ndh=64
    res_size, att_size, ndh = 32, 16, 64
    batch = 32  # tb=16 below -> grid=(2,) so the batch pipeline is exercised

    key = jax.random.PRNGKey(0)
    k_x, k_att, k_p = jax.random.split(key, 3)

    x = jax.random.normal(k_x, (batch, res_size), dtype=jnp.float32)
    att = jax.random.normal(k_att, (batch, att_size), dtype=jnp.float32)
    params = init_params(k_p, res_size, att_size, ndh)

    # Pure-JAX reference (same semantics as the PyTorch forward; sigmoid unused).
    h_ref = jnp.concatenate([x, att], axis=1)
    z1 = h_ref @ params["w1"].T + params["b1"]
    a1 = jnp.where(z1 > 0, z1, 0.2 * z1)
    ref = a1 @ params["w2"].T + params["b2"]

    # --- f32 parity path: must match the PyTorch-style reference exactly. ----
    kp_f32 = prepare_params(params, res_size, weights_dtype=jnp.float32)
    kp_f32 = jax.tree_util.tree_map(jax.block_until_ready, kp_f32)
    fwd_f32 = jax.jit(functools.partial(mlp_critic_forward, tb=16))
    out_f32 = jax.block_until_ready(fwd_f32(x, att, kp_f32))
    assert out_f32.shape == (batch, 1)
    assert jnp.allclose(out_f32, ref, atol=1e-5, rtol=1e-5)

    # --- bf16 weights (production default): loose tolerance vs f32 reference.
    kp_bf16 = prepare_params(params, res_size)  # bf16 weights, f32 accumulation
    kp_bf16 = jax.tree_util.tree_map(jax.block_until_ready, kp_bf16)
    fwd_bf16 = jax.jit(functools.partial(mlp_critic_forward, tb=16))
    out_bf16 = jax.block_until_ready(fwd_bf16(x, att, kp_bf16))
    assert out_bf16.shape == (batch, 1)
    assert jnp.allclose(out_bf16, ref, atol=1e-2)

    print("KERNEL_OK")
</pallas_src>

<mosaic_0001>
module attributes {stable_mosaic.version = 11 : i64} {
  func.func @_critic_kernel(%arg0: i32, %arg1: memref<16x32xf32, #tpu.memory_space<vmem>>, %arg2: memref<16x16xf32, #tpu.memory_space<vmem>>, %arg3: memref<32x64xf32, #tpu.memory_space<vmem>>, %arg4: memref<16x64xf32, #tpu.memory_space<vmem>>, %arg5: memref<1x64xf32, #tpu.memory_space<vmem>>, %arg6: memref<64x128xf32, #tpu.memory_space<vmem>>, %arg7: memref<1x1xf32, #tpu.memory_space<smem>>, %arg8: memref<16x128xf32, #tpu.memory_space<vmem>>) attributes {dimension_semantics = [#tpu.dimension_semantics<parallel>], iteration_bounds = array<i64: 2>, scalar_prefetch = 0 : i64, scratch_operands = 0 : i64, tpu.core_type = #tpu.core_type<tc>, window_params = [{transform_indices = @transform_0, window_bounds = array<i64: 16, 32>}, {transform_indices = @transform_1, window_bounds = array<i64: 16, 16>}, {pipeline_mode = #tpu.pipeline_mode<synchronous>, transform_indices = @transform_2, window_bounds = array<i64: 32, 64>}, {pipeline_mode = #tpu.pipeline_mode<synchronous>, transform_indices = @transform_3, window_bounds = array<i64: 16, 64>}, {pipeline_mode = #tpu.pipeline_mode<synchronous>, transform_indices = @transform_4, window_bounds = array<i64: 1, 64>}, {pipeline_mode = #tpu.pipeline_mode<synchronous>, transform_indices = @transform_5, window_bounds = array<i64: 64, 128>}, {transform_indices = @transform_6, window_bounds = array<i64: 1, 1>}, {transform_indices = @transform_7, window_bounds = array<i64: 16, 128>}]} {
    %c0 = arith.constant 0 : index
    %c0_0 = arith.constant 0 : index
    %0 = vector.load %arg1[%c0, %c0_0] : memref<16x32xf32, #tpu.memory_space<vmem>>, vector<16x32xf32>
    %c0_1 = arith.constant 0 : index
    %c0_2 = arith.constant 0 : index
    %1 = vector.load %arg3[%c0_1, %c0_2] : memref<32x64xf32, #tpu.memory_space<vmem>>, vector<32x64xf32>
    %cst = arith.constant dense<0.000000e+00> : vector<16x64xf32>
    %2 = tpu.matmul %0, %1, %cst {dimension_numbers = #tpu.dot_dimension_numbers<[1], [0], [0], [1], [0, 0, 1, 1], [], []>} : vector<16x32xf32>, vector<32x64xf32>, vector<16x64xf32> -> vector<16x64xf32>
    %c0_3 = arith.constant 0 : index
    %c0_4 = arith.constant 0 : index
    %3 = vector.load %arg2[%c0_3, %c0_4] : memref<16x16xf32, #tpu.memory_space<vmem>>, vector<16x16xf32>
    %c0_5 = arith.constant 0 : index
    %c0_6 = arith.constant 0 : index
    %4 = vector.load %arg4[%c0_5, %c0_6] : memref<16x64xf32, #tpu.memory_space<vmem>>, vector<16x64xf32>
    %cst_7 = arith.constant dense<0.000000e+00> : vector<16x64xf32>
    %5 = tpu.matmul %3, %4, %cst_7 {dimension_numbers = #tpu.dot_dimension_numbers<[1], [0], [0], [1], [0, 0, 1, 1], [], []>} : vector<16x16xf32>, vector<16x64xf32>, vector<16x64xf32> -> vector<16x64xf32>
    %6 = arith.addf %2, %5 : vector<16x64xf32>
    %c0_8 = arith.constant 0 : index
    %c0_9 = arith.constant 0 : index
    %7 = vector.load %arg5[%c0_8, %c0_9] : memref<1x64xf32, #tpu.memory_space<vmem>>, vector<1x64xf32>
    %8 = vector.broadcast %7 : vector<1x64xf32> to vector<16x64xf32>
    %9 = arith.addf %6, %8 : vector<16x64xf32>
    %cst_10 = arith.constant 2.000000e-01 : f32
    %10 = vector.broadcast %cst_10 : f32 to vector<16x64xf32>
    %11 = arith.mulf %10, %9 : vector<16x64xf32>
    %12 = arith.maximumf %9, %11 : vector<16x64xf32>
    %c0_11 = arith.constant 0 : index
    %c0_12 = arith.constant 0 : index
    %13 = vector.load %arg6[%c0_11, %c0_12] : memref<64x128xf32, #tpu.memory_space<vmem>>, vector<64x128xf32>
    %cst_13 = arith.constant dense<0.000000e+00> : vector<16x128xf32>
    %14 = tpu.matmul %12, %13, %cst_13 {dimension_numbers = #tpu.dot_dimension_numbers<[1], [0], [0], [1], [0, 0, 1, 1], [], []>} : vector<16x64xf32>, vector<64x128xf32>, vector<16x128xf32> -> vector<16x128xf32>
    %c0_14 = arith.constant 0 : index
    %c0_15 = arith.constant 0 : index
    %15 = memref.load %arg7[%c0_14, %c0_15] : memref<1x1xf32, #tpu.memory_space<smem>>
    %16 = vector.broadcast %15 : f32 to vector<16x128xf32>
    %17 = arith.addf %14, %16 : vector<16x128xf32>
    %c0_16 = arith.constant 0 : index
    %c0_17 = arith.constant 0 : index
    %18 = vector.load %arg8[%c0_16, %c0_17] : memref<16x128xf32, #tpu.memory_space<vmem>>, vector<16x128xf32>
    tpu.vector_store %arg8[%c0_16, %c0_17], %17 {strides = array<i32>} : memref<16x128xf32, #tpu.memory_space<vmem>>, vector<16x128xf32>,
    return
  }
  func.func @transform_0(%arg0: i32) -> (i32, i32) {
    %c0_i32 = arith.constant 0 : i32
    %c0_i32_0 = arith.constant 0 : i32
    return %arg0, %c0_i32 : i32, i32
  }
  func.func @transform_1(%arg0: i32) -> (i32, i32) {
    %c0_i32 = arith.constant 0 : i32
    %c0_i32_0 = arith.constant 0 : i32
    return %arg0, %c0_i32 : i32, i32
  }
  func.func @transform_2(%arg0: i32) -> (i32, i32) {
    %c0_i32 = arith.constant 0 : i32
    %c0_i32_0 = arith.constant 0 : i32
    %c0_i32_1 = arith.constant 0 : i32
    return %c0_i32, %c0_i32_0 : i32, i32
  }
  func.func @transform_3(%arg0: i32) -> (i32, i32) {
    %c0_i32 = arith.constant 0 : i32
    %c0_i32_0 = arith.constant 0 : i32
    %c0_i32_1 = arith.constant 0 : i32
    return %c0_i32, %c0_i32_0 : i32, i32
  }
  func.func @transform_4(%arg0: i32) -> (i32, i32) {
    %c0_i32 = arith.constant 0 : i32
    %c0_i32_0 = arith.constant 0 : i32
    %c0_i32_1 = arith.constant 0 : i32
    return %c0_i32, %c0_i32_0 : i32, i32
  }
  func.func @transform_5(%arg0: i32) -> (i32, i32) {
    %c0_i32 = arith.constant 0 : i32
    %c0_i32_0 = arith.constant 0 : i32
    %c0_i32_1 = arith.constant 0 : i32
    return %c0_i32, %c0_i32_0 : i32, i32
  }
  func.func @transform_6(%arg0: i32) -> (i32, i32) {
    %c0_i32 = arith.constant 0 : i32
    %c0_i32_0 = arith.constant 0 : i32
    %c0_i32_1 = arith.constant 0 : i32
    return %c0_i32, %c0_i32_0 : i32, i32
  }
  func.func @transform_7(%arg0: i32) -> (i32, i32) {
    %c0_i32 = arith.constant 0 : i32
    %c0_i32_0 = arith.constant 0 : i32
    return %arg0, %c0_i32 : i32, i32
  }
}

</mosaic_0001>

<llo_original>
// kernel: mlp_critic_forward.1
$region0: #{mlp_critic_forward.1}
  #allocation0 [shape = 'u32[]', space=smem, size = 0x4, offset = 0x4, fixed_abs, tag = 'smem constant byte address 0x4 - core index']
  #allocation1 [shape = 'u32[72,128]{1,0:T(1,128)}', space=vmem, size = 0x9000, scoped, tag = 'internal scratch']
  #allocation2 [shape = 'f32[1,1]{1,0:T(1,128)S(6)}', space=smem, size = 0x200, scoped, tag = 'scoped memory for mlp_critic_forward.1']
  %s0 = inlined_call_operand.vmem [shape: f32[32,32], index: 0, kind: input, shape index: {}]
  %s1 = inlined_call_operand.vmem [shape: f32[32,16], index: 1, kind: input, shape index: {}]
  %s2 = inlined_call_operand.hbm [shape: f32[32,64], index: 2, kind: input, shape index: {}]
  %s3 = inlined_call_operand.vmem [shape: f32[16,64], index: 3, kind: input, shape index: {}]
  %s4 = inlined_call_operand.vmem [shape: f32[1,64], index: 4, kind: input, shape index: {}]
  %s5 = inlined_call_operand.hbm [shape: f32[64,128], index: 5, kind: input, shape index: {}]
  %s6 = inlined_call_operand.<no memory space> [shape: f32[1,1], index: 6, kind: input, shape index: {}]
  %s7 = inlined_call_operand.vmem [shape: f32[32,128], index: 7, kind: output, shape index: {}]
  %s8 = sld [smem:[#allocation0]]
  $region69: #{mlp_critic_forward.1} parent=0
    _
  %s10 = ssub.s32 1, %s8
  %s11 = scalar_select 0, %s10, %s8
  %12 = sst [smem:[#allocation2]] %s6
  $region1: #{mlp_critic_forward.1} parent=0
    #allocation3 [shape = 'u8[16384]{0}', space=vmem, size = 0x4000, scoped, tag = 'input window, operand 2, single buffered']
    #allocation4 [shape = 's32[2]{0}', space=sflag, size = 0x8, scoped, tag = 'scoped memory for mlp_critic_forward.1']
    #allocation5 [shape = 'u8[32768]{0}', space=vmem, size = 0x8000, scoped, tag = 'input window, operand 5, single buffered']
    #allocation6 [shape = 's32[1]{0}', space=sflag, size = 0x4, scoped, tag = 'scoped memory for mlp_critic_forward.1']
    %13 = vsyncpa [#allocation4], 0
    %14 = vsyncpa [#allocation6], 0
    loop: start=0, step=1, limit=4
    $region2: #{mlp_critic_forward.1} parent=1 // loop_pre_header
      _
    $region3: #{mlp_critic_forward.1} parent=1 // loop_header
      %s16 = sphi 0, %s20
      %p17 = scmp.ge.s32.totalorder %s16, 4
      %s26 = sphi 0, %s28
      %s29 = sphi 0, %s26
      %s30 = sphi 0, %s29
      %s46 = sphi 0, %s30
      %s52 = sphi 0, %s54
      %s55 = sphi 0, %s52
      %s56 = sphi 0, %s55
      %s72 = sphi 0, %s56
      %s76 = sphi 0, %s76
      %s78 = sphi 0, %s76
      %s79 = sphi 0, %s78
      %s93 = sphi 0, %s79
      %s97 = sphi 0, %s97
      %s99 = sphi 0, %s97
      %s100 = sphi 0, %s99
      %s114 = sphi 0, %s100
      %s118 = sphi 0, %s118
      %s120 = sphi 0, %s118
      %s121 = sphi 0, %s120
      %s135 = sphi 0, %s121
      %s139 = sphi 0, %s139
      %s141 = sphi 0, %s139
      %s142 = sphi 0, %s141
      %s156 = sphi 0, %s142
      %s160 = sphi 0, %s160
      %s162 = sphi 0, %s160
      %s163 = sphi 0, %s162
      %s177 = sphi 0, %s163
      %s183 = sphi 0, %s185
      %s186 = sphi 0, %s183
      %s187 = sphi 0, %s186
      %s203 = sphi 0, %s187
    $region4: #{mlp_critic_forward.1} parent=1 // loop_header_branch
      %19 = sbr.rel (%p17) target = $region8
    $region5: #{mlp_critic_forward.1} parent=1 // loop_body
      %s21 = ssub.s32 %s16, 1
      %s22 = ssub.s32 %s16, 2
      %s23 = sadd.s32 %s16, 1
      %s24 = ssub.s32 %s16, %s23
      %p25 = scmp.eq.s32.totalorder %s24, 0
      %s27 = sadd.s32 %s26, 1
      %s28 = scalar_select %p25, %s26, %s27
      %p31 = pneg %p25
      %p32 = scmp.eq.s32.totalorder %s16, 1
      %p33 = por %p31, %p32
      %p34 = scmp.ne.s32.totalorder %s26, %s29
      %p35 = scmp.eq.s32.totalorder %s16, 0
      %p36 = por %p34, %p35
      %p37 = scmp.ne.s32.totalorder %s26, %s29
      %p38 = scmp.eq.s32.totalorder %s21, 1
      %p39 = por %p37, %p38
      %p40 = scmp.ne.s32.totalorder %s29, %s30
      %p41 = scmp.eq.s32.totalorder %s21, 0
      %p42 = por %p40, %p41
      %p43 = scmp.ne.s32.totalorder %s29, %s30
      %p44 = scmp.eq.s32.totalorder %s22, 1
      %p45 = por %p43, %p44
      %p47 = scmp.ne.s32.totalorder %s30, %s46
      %p48 = scmp.eq.s32.totalorder %s22, 0
      %p49 = por %p47, %p48
      %s50 = ssub.s32 %s16, %s23
      %p51 = scmp.eq.s32.totalorder %s50, 0
      %s53 = sadd.s32 %s52, 1
      %s54 = scalar_select %p51, %s52, %s53
      %p57 = pneg %p51
      %p58 = scmp.eq.s32.totalorder %s16, 1
      %p59 = por %p57, %p58
      %p60 = scmp.ne.s32.totalorder %s52, %s55
      %p61 = scmp.eq.s32.totalorder %s16, 0
      %p62 = por %p60, %p61
      %p63 = scmp.ne.s32.totalorder %s52, %s55
      %p64 = scmp.eq.s32.totalorder %s21, 1
      %p65 = por %p63, %p64
      %p66 = scmp.ne.s32.totalorder %s55, %s56
      %p67 = scmp.eq.s32.totalorder %s21, 0
      %p68 = por %p66, %p67
      %p69 = scmp.ne.s32.totalorder %s55, %s56
      %p70 = scmp.eq.s32.totalorder %s22, 1
      %p71 = por %p69, %p70
      %p73 = scmp.ne.s32.totalorder %s56, %s72
      %p74 = scmp.eq.s32.totalorder %s22, 0
      %p75 = por %p73, %p74
      %s77 = sadd.s32 %s76, 1
      %p80 = scmp.eq.s32.totalorder %s16, 1
      %p81 = scmp.ne.s32.totalorder %s76, %s78
      %p82 = scmp.eq.s32.totalorder %s16, 0
      %p83 = por %p81, %p82
      %p84 = scmp.ne.s32.totalorder %s76, %s78
      %p85 = scmp.eq.s32.totalorder %s21, 1
      %p86 = por %p84, %p85
      %p87 = scmp.ne.s32.totalorder %s78, %s79
      %p88 = scmp.eq.s32.totalorder %s21, 0
      %p89 = por %p87, %p88
      %p90 = scmp.ne.s32.totalorder %s78, %s79
      %p91 = scmp.eq.s32.totalorder %s22, 1
      %p92 = por %p90, %p91
      %p94 = scmp.ne.s32.totalorder %s79, %s93
      %p95 = scmp.eq.s32.totalorder %s22, 0
      %p96 = por %p94, %p95
      %s98 = sadd.s32 %s97, 1
      %p101 = scmp.eq.s32.totalorder %s16, 1
      %p102 = scmp.ne.s32.totalorder %s97, %s99
      %p103 = scmp.eq.s32.totalorder %s16, 0
      %p104 = por %p102, %p103
      %p105 = scmp.ne.s32.totalorder %s97, %s99
      %p106 = scmp.eq.s32.totalorder %s21, 1
      %p107 = por %p105, %p106
      %p108 = scmp.ne.s32.totalorder %s99, %s100
      %p109 = scmp.eq.s32.totalorder %s21, 0
      %p110 = por %p108, %p109
      %p111 = scmp.ne.s32.totalorder %s99, %s100
      %p112 = scmp.eq.s32.totalorder %s22, 1
      %p113 = por %p111, %p112
      %p115 = scmp.ne.s32.totalorder %s100, %s114
      %p116 = scmp.eq.s32.totalorder %s22, 0
      %p117 = por %p115, %p116
      %s119 = sadd.s32 %s118, 1
      %p122 = scmp.eq.s32.totalorder %s16, 1
      %p123 = scmp.ne.s32.totalorder %s118, %s120
      %p124 = scmp.eq.s32.totalorder %s16, 0
      %p125 = por %p123, %p124
      %p126 = scmp.ne.s32.totalorder %s118, %s120
      %p127 = scmp.eq.s32.totalorder %s21, 1
      %p128 = por %p126, %p127
      %p129 = scmp.ne.s32.totalorder %s120, %s121
      %p130 = scmp.eq.s32.totalorder %s21, 0
      %p131 = por %p129, %p130
      %p132 = scmp.ne.s32.totalorder %s120, %s121
      %p133 = scmp.eq.s32.totalorder %s22, 1
      %p134 = por %p132, %p133
      %p136 = scmp.ne.s32.totalorder %s121, %s135
      %p137 = scmp.eq.s32.totalorder %s22, 0
      %p138 = por %p136, %p137
      %s140 = sadd.s32 %s139, 1
      %p143 = scmp.eq.s32.totalorder %s16, 1
      %p144 = scmp.ne.s32.totalorder %s139, %s141
      %p145 = scmp.eq.s32.totalorder %s16, 0
      %p146 = por %p144, %p145
      %p147 = scmp.ne.s32.totalorder %s139, %s141
      %p148 = scmp.eq.s32.totalorder %s21, 1
      %p149 = por %p147, %p148
      %p150 = scmp.ne.s32.totalorder %s141, %s142
      %p151 = scmp.eq.s32.totalorder %s21, 0
      %p152 = por %p150, %p151
      %p153 = scmp.ne.s32.totalorder %s141, %s142
      %p154 = scmp.eq.s32.totalorder %s22, 1
      %p155 = por %p153, %p154
      %p157 = scmp.ne.s32.totalorder %s142, %s156
      %p158 = scmp.eq.s32.totalorder %s22, 0
      %p159 = por %p157, %p158
      %s161 = sadd.s32 %s160, 1
      %p164 = scmp.eq.s32.totalorder %s16, 1
      %p165 = scmp.ne.s32.totalorder %s160, %s162
      %p166 = scmp.eq.s32.totalorder %s16, 0
      %p167 = por %p165, %p166
      %p168 = scmp.ne.s32.totalorder %s160, %s162
      %p169 = scmp.eq.s32.totalorder %s21, 1
      %p170 = por %p168, %p169
      %p171 = scmp.ne.s32.totalorder %s162, %s163
      %p172 = scmp.eq.s32.totalorder %s21, 0
      %p173 = por %p171, %p172
      %p174 = scmp.ne.s32.totalorder %s162, %s163
      %p175 = scmp.eq.s32.totalorder %s22, 1
      %p176 = por %p174, %p175
      %p178 = scmp.ne.s32.totalorder %s163, %s177
      %p179 = scmp.eq.s32.totalorder %s22, 0
      %p180 = por %p178, %p179
      %s181 = ssub.s32 %s16, %s23
      %p182 = scmp.eq.s32.totalorder %s181, 0
      %s184 = sadd.s32 %s183, 1
      %s185 = scalar_select %p182, %s183, %s184
      %p188 = pneg %p182
      %p189 = scmp.eq.s32.totalorder %s16, 1
      %p190 = por %p188, %p189
      %p191 = scmp.ne.s32.totalorder %s183, %s186
      %p192 = scmp.eq.s32.totalorder %s16, 0
      %p193 = por %p191, %p192
      %p194 = scmp.ne.s32.totalorder %s183, %s186
      %p195 = scmp.eq.s32.totalorder %s21, 1
      %p196 = por %p194, %p195
      %p197 = scmp.ne.s32.totalorder %s186, %s187
      %p198 = scmp.eq.s32.totalorder %s21, 0
      %p199 = por %p197, %p198
      %p200 = scmp.ne.s32.totalorder %s186, %s187
      %p201 = scmp.eq.s32.totalorder %s22, 1
      %p202 = por %p200, %p201
      %p204 = scmp.ne.s32.totalorder %s187, %s203
      %p205 = scmp.eq.s32.totalorder %s22, 0
      %p206 = por %p204, %p205
      %p207 = scmp.le.s32.totalorder 1, %s16
      %p208 = scmp.lt.s32.totalorder %s16, 3
      %p209 = pnand %p207, %p208
      %p210 = pneg %p209
      // Predicated region
      $region9: #{mlp_critic_forward.1} parent=5 // pred_check
        _
      $region10: #{mlp_critic_forward.1} parent=5 // pred_check_branch
        %212 = sbr.rel (%p209) target = $region12
      $region11: #{mlp_critic_forward.1} parent=5 // pred_region
        %s213 = ssub.s32 %s16, 1
        // Predicated region
        $region13: #{mlp_critic_forward.1} parent=11 // pred_check
          %p214 = pneg %p89
        $region14: #{mlp_critic_forward.1} parent=11 // pred_check_branch
          %216 = sbr.rel (%p214) target = $region16
        $region15: #{mlp_critic_forward.1} parent=11 // pred_region
          %218 = vsyncadd [#allocation4], 0
          %s219 = sshll.u32 %s2, 4
          %s220 = int_to_ptr.hbm [resolvable:$true] %s219
          %s221 = sshll.u32 [#allocation3], 4
          %s222 = int_to_ptr.vmem [resolvable:$true] %s221
          %227 = dma.hbm_to_vmem [thread:$0]  %s220, 512, %s222, [#allocation4], 128, 128, 8
        $region16: #{mlp_critic_forward.1} parent=11 // pred_fallthru
          _
        // Predicated region
        $region17: #{mlp_critic_forward.1} parent=11 // pred_check
          %p228 = pneg %p110
        $region18: #{mlp_critic_forward.1} parent=11 // pred_check_branch
          %230 = sbr.rel (%p228) target = $region20
        $region19: #{mlp_critic_forward.1} parent=11 // pred_region
          _
        $region20: #{mlp_critic_forward.1} parent=11 // pred_fallthru
          _
        // Predicated region
        $region21: #{mlp_critic_forward.1} parent=11 // pred_check
          %p231 = pneg %p131
        $region22: #{mlp_critic_forward.1} parent=11 // pred_check_branch
          %233 = sbr.rel (%p231) target = $region24
        $region23: #{mlp_critic_forward.1} parent=11 // pred_region
          _
        $region24: #{mlp_critic_forward.1} parent=11 // pred_fallthru
          _
        // Predicated region
        $region25: #{mlp_critic_forward.1} parent=11 // pred_check
          %p234 = pneg %p152
        $region26: #{mlp_critic_forward.1} parent=11 // pred_check_branch
          %236 = sbr.rel (%p234) target = $region28
        $region27: #{mlp_critic_forward.1} parent=11 // pred_region
          %238 = vsyncadd [#allocation6], 0
          %s239 = sshll.u32 %s5, 4
          %s240 = int_to_ptr.hbm [resolvable:$true] %s239
          %s241 = sshll.u32 [#allocation5], 4
          %s242 = int_to_ptr.vmem [resolvable:$true] %s241
          %247 = dma.hbm_to_vmem [thread:$0]  %s240, 1024, %s242, [#allocation6], 128, 128, 8
        $region28: #{mlp_critic_forward.1} parent=11 // pred_fallthru
          _
        // Predicated region
        $region29: #{mlp_critic_forward.1} parent=11 // pred_check
          %p248 = pneg %p173
        $region30: #{mlp_critic_forward.1} parent=11 // pred_check_branch
          %250 = sbr.rel (%p248) target = $region32
        $region31: #{mlp_critic_forward.1} parent=11 // pred_region
          _
        $region32: #{mlp_critic_forward.1} parent=11 // pred_fallthru
          _
      $region12: #{mlp_critic_forward.1} parent=5 // pred_fallthru
        _
      %p251 = scmp.lt.s32.totalorder %s16, 2
      // Predicated region
      $region33: #{mlp_critic_forward.1} parent=5 // pred_check
        %p252 = pneg %p251
      $region34: #{mlp_critic_forward.1} parent=5 // pred_check_branch
        %254 = sbr.rel (%p252) target = $region36
      $region35: #{mlp_critic_forward.1} parent=5 // pred_region
        // Predicated region
        $region37: #{mlp_critic_forward.1} parent=35 // pred_check
          %p255 = pneg %p36
        $region38: #{mlp_critic_forward.1} parent=35 // pred_check_branch
          %257 = sbr.rel (%p255) target = $region40
        $region39: #{mlp_critic_forward.1} parent=35 // pred_region
          %s258 = smul.u32 2, %s16
          %p259 = scmp.lt.s32.totalorder %s258, 3
          %s260 = scalar_select %p259, %s258, 3
          %s261 = smul.addr %s260, 8
          %s262 = scalar_lea.vmem %s0, %s261
          %s263 = smul.u32 2, %s16
        $region40: #{mlp_critic_forward.1} parent=35 // pred_fallthru
          _
        // Predicated region
        $region41: #{mlp_critic_forward.1} parent=35 // pred_check
          %p264 = pneg %p62
        $region42: #{mlp_critic_forward.1} parent=35 // pred_check_branch
          %266 = sbr.rel (%p264) target = $region44
        $region43: #{mlp_critic_forward.1} parent=35 // pred_region
          %s267 = smul.u32 2, %s16
          %p268 = scmp.lt.s32.totalorder %s267, 3
          %s269 = scalar_select %p268, %s267, 3
          %s270 = smul.addr %s269, 8
          %s271 = scalar_lea.vmem %s1, %s270
          %s272 = smul.u32 2, %s16
        $region44: #{mlp_critic_forward.1} parent=35 // pred_fallthru
          _
      $region36: #{mlp_critic_forward.1} parent=5 // pred_fallthru
        _
      %p273 = scmp.le.s32.totalorder 1, %s16
      %p274 = scmp.lt.s32.totalorder %s16, 3
      %p275 = pnand %p273, %p274
      %p276 = pneg %p275
      // Predicated region
      $region45: #{mlp_critic_forward.1} parent=5 // pred_check
        _
      $region46: #{mlp_critic_forward.1} parent=5 // pred_check_branch
        %278 = sbr.rel (%p275) target = $region48
      $region47: #{mlp_critic_forward.1} parent=5 // pred_region
        %s279 = ssub.s32 %s16, 1
        // Predicated region
        $region49: #{mlp_critic_forward.1} parent=47 // pred_check
          %p280 = pneg %p89
        $region50: #{mlp_critic_forward.1} parent=47 // pred_check_branch
          %282 = sbr.rel (%p280) target = $region52
        $region51: #{mlp_critic_forward.1} parent=47 // pred_region
          %284 = dma.done [#allocation4], 512
        $region52: #{mlp_critic_forward.1} parent=47 // pred_fallthru
          _
        // Predicated region
        $region53: #{mlp_critic_forward.1} parent=47 // pred_check
          %p285 = pneg %p152
        $region54: #{mlp_critic_forward.1} parent=47 // pred_check_branch
          %287 = sbr.rel (%p285) target = $region56
        $region55: #{mlp_critic_forward.1} parent=47 // pred_region
          %289 = dma.done [#allocation6], 1024
        $region56: #{mlp_critic_forward.1} parent=47 // pred_fallthru
          _
        %s290 = smul.u32 2, %s21
        %p291 = scmp.lt.s32.totalorder %s290, 3
        %s292 = scalar_select %p291, %s290, 3
        %s293 = smul.addr %s292, 8
        %s294 = scalar_lea.vmem %s0, %s293
        %p295 = pneg %p42
        %p296 = pneg %p39
        %s297 = smul.u32 2, %s21
        %p298 = scmp.lt.s32.totalorder %s297, 3
        %s299 = scalar_select %p298, %s297, 3
        %s300 = smul.addr %s299, 8
        %s301 = scalar_lea.vmem %s1, %s300
        %p302 = pneg %p68
        %p303 = pneg %p65
        %p304 = pneg %p89
        %p305 = pneg %p86
        %p306 = pneg %p110
        %p307 = pneg %p107
        %p308 = pneg %p131
        %p309 = pneg %p128
        %p310 = pneg %p152
        %p311 = pneg %p149
        %p312 = pneg %p173
        %p313 = pneg %p170
        %p314 = pneg %p199
        %p315 = pneg %p196
        %s316 = smul.u32 2, %s21
        %p317 = scmp.lt.s32.totalorder %s316, 3
        %s318 = scalar_select %p317, %s316, 3
        %s319 = smul.addr %s318, 8
        %s320 = scalar_lea.vmem %s7, %s319
        %s321 = smul.u32 2, %s21
        %p322 = scmp.lt.s32.totalorder %s321, 3
        %s323 = scalar_select %p322, %s321, 3
        %s324 = smul.addr %s323, 8
        %s325 = scalar_lea.vmem %s0, %s324
        %s326 = smul.u32 2, %s21
        %s327 = smul.u32 2, %s21
        %p328 = scmp.lt.s32.totalorder %s327, 3
        %s329 = scalar_select %p328, %s327, 3
        %s330 = smul.addr %s329, 8
        %s331 = scalar_lea.vmem %s1, %s330
        %s332 = smul.u32 2, %s21
        %s333 = smul.u32 2, %s21
        %p334 = scmp.lt.s32.totalorder %s333, 3
        %s335 = scalar_select %p334, %s333, 3
        %s336 = smul.addr %s335, 8
        %s337 = scalar_lea.vmem %s7, %s336
        %s338 = smul.u32 2, %s21
        %v339 = vld [vmem:[%s325] sm:$0xff]
        %v340 = vld [vmem:[%s325 + $0x8] sm:$0xff]
        %v341 = vld [vmem:[#allocation3] sm:$0xff]
        %v342 = vld [vmem:[#allocation3 + $0x8] sm:$0xff]
        %v343 = vld [vmem:[#allocation3 + $0x10] sm:$0xff]
        %v344 = vld [vmem:[#allocation3 + $0x18] sm:$0xff]
        %v345 = vld [vmem:[%s331] sm:$0xff]
        %v346 = vld [vmem:[%s331 + $0x8] sm:$0xff]
        %v347 = vld [vmem:[%s3] sm:$0xff]
        %v348 = vld [vmem:[%s3 + $0x8] sm:$0xff]
        %vm349 = vcmask 130048
        %v351 = vsel %vm349, %v345, 0
        %v354 = vsel %vm349, %v346, 0
        %356 = vmatpush.msra.mxu0 0.0
        %357 = vmatpush.msra.mxu0 0.0
        %358 = vmatpush.msra.mxu0 0.0
        %359 = vmatpush.msra.mxu0 0.0
        %360 = vmatpush.msra.mxu0 0.0
        %361 = vmatpush.msra.mxu0 0.0
        %362 = vmatpush.msra.mxu0 0.0
        %363 = vmatpush.msra.mxu0 0.0
        %364 = vmatpush.msra.mxu0 0.0
        %365 = vmatpush.msra.mxu0 0.0
        %366 = vmatpush.msra.mxu0 0.0
        %367 = vmatpush.msra.mxu0 0.0
        %368 = vmatpush.msra.mxu0 0.0
        %369 = vmatpush.msra.mxu0 0.0
        %370 = vmatpush.msra.mxu0 %v348
        %371 = vmatpush.msra.mxu0 %v347
        %372 = vmatmul.f32.gmra.mxu0 %v351
        %v373 = vpop.f32.mrf.mxu0
        %v374 = vadd.f32 0.0, %v373
        %375 = vmatmul.f32.gmra.mxu0 %v354
        %v376 = vpop.f32.mrf.mxu0
        %v377 = vadd.f32 0.0, %v376
        %378 = vdwg.mxu0
        %vm379 = vcmask 261120
        %v381 = vsel %vm379, %v339, 0
        %v384 = vsel %vm379, %v340, 0
        %386 = vmatpush.msra.mxu0 0.0
        %387 = vmatpush.msra.mxu0 0.0
        %388 = vmatpush.msra.mxu0 0.0
        %389 = vmatpush.msra.mxu0 0.0
        %390 = vmatpush.msra.mxu0 0.0
        %391 = vmatpush.msra.mxu0 0.0
        %392 = vmatpush.msra.mxu0 0.0
        %393 = vmatpush.msra.mxu0 0.0
        %394 = vmatpush.msra.mxu0 0.0
        %395 = vmatpush.msra.mxu0 0.0
        %396 = vmatpush.msra.mxu0 0.0
        %397 = vmatpush.msra.mxu0 0.0
        %398 = vmatpush.msra.mxu0 %v344
        %399 = vmatpush.msra.mxu0 %v343
        %400 = vmatpush.msra.mxu0 %v342
        %401 = vmatpush.msra.mxu0 %v341
        %402 = vmatmul.f32.gmra.mxu0 %v381
        %v403 = vpop.f32.mrf.mxu0
        %v404 = vadd.f32 %v374, %v403
        %405 = vmatmul.f32.gmra.mxu0 %v384
        %v406 = vpop.f32.mrf.mxu0
        %v407 = vadd.f32 %v377, %v406
        %408 = vdwg.mxu0
        %v409 = vld [vmem:[%s4] sm:$0x1]
        %v411 = vperm.slane %v409, 0
        %v413 = vadd.f32 %v404, %v411
        %v414 = vadd.f32 %v407, %v411
        %v415 = vmul.f32 %v413, 0.2
        %v416 = vmul.f32 %v414, 0.2
        %v417 = vmax.f32 %v413, %v415
        %v418 = vmax.f32 %v414, %v416
        %v419 = vld [vmem:[#allocation5] sm:$0xff]
        %v420 = vld [vmem:[#allocation5 + $0x8] sm:$0xff]
        %v421 = vld [vmem:[#allocation5 + $0x10] sm:$0xff]
        %v422 = vld [vmem:[#allocation5 + $0x18] sm:$0xff]
        %v423 = vld [vmem:[#allocation5 + $0x20] sm:$0xff]
        %v424 = vld [vmem:[#allocation5 + $0x28] sm:$0xff]
        %v425 = vld [vmem:[#allocation5 + $0x30] sm:$0xff]
        %v426 = vld [vmem:[#allocation5 + $0x38] sm:$0xff]
        %s427 = sld [smem:[#allocation2]]
        %v428 = vstv %s427
        %vm429 = vcmask 523264
        %v431 = vsel %vm429, %v417, 0
        %v434 = vsel %vm429, %v418, 0
        %436 = vmatpush.msra.mxu0 0.0
        %437 = vmatpush.msra.mxu0 0.0
        %438 = vmatpush.msra.mxu0 0.0
        %439 = vmatpush.msra.mxu0 0.0
        %440 = vmatpush.msra.mxu0 0.0
        %441 = vmatpush.msra.mxu0 0.0
        %442 = vmatpush.msra.mxu0 0.0
        %443 = vmatpush.msra.mxu0 0.0
        %444 = vmatpush.msra.mxu0 %v426
        %445 = vmatpush.msra.mxu0 %v425
        %446 = vmatpush.msra.mxu0 %v424
        %447 = vmatpush.msra.mxu0 %v423
        %448 = vmatpush.msra.mxu0 %v422
        %449 = vmatpush.msra.mxu0 %v421
        %450 = vmatpush.msra.mxu0 %v420
        %451 = vmatpush.msra.mxu0 %v419
        %452 = vmatmul.f32.gmra.mxu0 %v431
        %v453 = vpop.f32.mrf.mxu0
        %v454 = vadd.f32 %v428, %v453
        %455 = vmatmul.f32.gmra.mxu0 %v434
        %v456 = vpop.f32.mrf.mxu0
        %v457 = vadd.f32 %v428, %v456
        %458 = vdwg.mxu0
        %459 = vst [vmem:[%s337] sm:$0xff] %v454
        %460 = vst [vmem:[%s337 + $0x8] sm:$0xff] %v457
        %s461 = smul.u32 2, %s21
        %p462 = scmp.lt.s32.totalorder %s461, 3
        %s463 = scalar_select %p462, %s461, 3
        %s464 = smul.addr %s463, 8
        %s465 = scalar_lea.vmem %s7, %s464
        // Predicated region
        $region57: #{mlp_critic_forward.1} parent=47 // pred_check
          %p466 = pneg %p196
        $region58: #{mlp_critic_forward.1} parent=47 // pred_check_branch
          %468 = sbr.rel (%p466) target = $region60
        $region59: #{mlp_critic_forward.1} parent=47 // pred_region
          %s469 = smul.u32 2, %s21
        $region60: #{mlp_critic_forward.1} parent=47 // pred_fallthru
          _
      $region48: #{mlp_critic_forward.1} parent=5 // pred_fallthru
        _
      %p470 = scmp.le.s32.totalorder 2, %s16
      // Predicated region
      $region61: #{mlp_critic_forward.1} parent=5 // pred_check
        %p471 = pneg %p470
      $region62: #{mlp_critic_forward.1} parent=5 // pred_check_branch
        %473 = sbr.rel (%p471) target = $region64
      $region63: #{mlp_critic_forward.1} parent=5 // pred_region
        %s474 = ssub.s32 %s16, 2
        // Predicated region
        $region65: #{mlp_critic_forward.1} parent=63 // pred_check
          %p475 = pneg %p202
        $region66: #{mlp_critic_forward.1} parent=63 // pred_check_branch
          %477 = sbr.rel (%p475) target = $region68
        $region67: #{mlp_critic_forward.1} parent=63 // pred_region
          %s478 = smul.u32 2, %s22
          %p479 = scmp.lt.s32.totalorder %s478, 3
          %s480 = scalar_select %p479, %s478, 3
          %s481 = smul.addr %s480, 8
          %s482 = scalar_lea.vmem %s7, %s481
        $region68: #{mlp_critic_forward.1} parent=63 // pred_fallthru
          _
      $region64: #{mlp_critic_forward.1} parent=5 // pred_fallthru
        _
    $region6: #{mlp_critic_forward.1} parent=1 // loop_footer
      %s20 = sadd.s32 1, %s16
    $region7: #{mlp_critic_forward.1} parent=1 // loop_footer_branch
      %15 = sbr.rel target = $region3
    $region8: #{mlp_critic_forward.1} parent=1 // loop_exit
      _
    %483 = vsyncpa [#allocation4], 1
    %s484 = scalar_lea.sflag [#allocation4], 1
    %485 = vsyncpa %s484, 1
    %486 = vsyncpa [#allocation6], 1

</llo_original>
